<compile_context>
chip_gen: v6e
topology: v6e:2x2x1
jax: 0.10.0
libtpu: 0.0.40
codegen_flags: <defaults>
</compile_context>

<pallas_src>
import functools

import jax
import jax.numpy as jnp
from jax.experimental import pallas as pl
from jax.experimental.pallas import tpu as pltpu


# --------------------------------------------------------------------------
# Kernels
# --------------------------------------------------------------------------
def _matmul_bias_kernel(x_ref, wt_ref, b_ref, o_ref, acc_ref):
    """o = x @ wt + b, k-reduction innermost, f32 VMEM accumulator."""
    @pl.when(pl.program_id(2) == 0)
    def _():
        acc_ref[...] = jnp.zeros_like(acc_ref)

    acc_ref[...] += jnp.dot(
        x_ref[...], wt_ref[...], preferred_element_type=jnp.float32
    )

    @pl.when(pl.program_id(2) == pl.num_programs(2) - 1)
    def _():
        o_ref[...] = (acc_ref[...] + b_ref[...].astype(jnp.float32)).astype(
            o_ref.dtype
        )


def _matmul_kernel(x_ref, wt_ref, o_ref, acc_ref):
    """o = x @ wt, no bias operand streamed at all."""
    @pl.when(pl.program_id(2) == 0)
    def _():
        acc_ref[...] = jnp.zeros_like(acc_ref)

    acc_ref[...] += jnp.dot(
        x_ref[...], wt_ref[...], preferred_element_type=jnp.float32
    )

    @pl.when(pl.program_id(2) == pl.num_programs(2) - 1)
    def _():
        o_ref[...] = acc_ref[...].astype(o_ref.dtype)


# --------------------------------------------------------------------------
# Tile / hardware heuristics
# --------------------------------------------------------------------------
def _round_up(x, m):
    return ((x + m - 1) // m) * m


def _cdiv(a, b):
    return (a + b - 1) // b


@functools.lru_cache(maxsize=1)
def _tpu_config():
    """Returns (scoped-VMEM budget bytes, multi-TensorCore heuristic)."""
    try:
        vmem_phys = int(pltpu.get_tpu_info().vmem_capacity_bytes)
    except Exception:
        vmem_phys = 64 * 1024 * 1024  # conservative (v7x-like) fallback
    if vmem_phys >= 100 * 1024 * 1024:
        # v5e / v6e: 128 MiB physical VMEM, single TensorCore.
        return 64 * 1024 * 1024, False
    # v7x-like: 64 MiB per TensorCore, 2 TensorCores per chip.
    return 40 * 1024 * 1024, True


def _pick_dim_tile(dim, cap, base=128, max_waste=0.05):
    """Largest tile t (multiple of `base`, t <= cap) whose round-up waste is
    <= max_waste, or that pads no more than the minimal base-aligned pad."""
    dim_p = _round_up(max(dim, 1), base)
    cap = max(base, min(cap, dim_p))
    best = base
    t = base
    while t <= cap:
        padded = _round_up(dim, t)
        if padded == dim_p or (padded - dim) <= max_waste * dim:
            best = t
        t += base
    return best


# --------------------------------------------------------------------------
# Jitted forward (cast + pad + pallas_call + slice fused in one program)
# --------------------------------------------------------------------------
@functools.partial(
    jax.jit, static_argnames=("tm", "tn", "tk", "n_used", "vmem_budget")
)
def _linear_forward(x2d, wt_pad, bias_pad, *, tm, tn, tk, n_used, vmem_budget):
    M, K = x2d.shape
    out_dtype = x2d.dtype

    mp = _round_up(M, tm)
    kp = _round_up(K, tk)            # == wt_pad.shape[0] by construction
    ng = _cdiv(n_used, tn)           # only the N blocks we actually need
    np_out = ng * tn

    x = x2d
    if x.dtype != wt_pad.dtype:
        x = x.astype(wt_pad.dtype)
    if (mp, kp) != (M, K):
        x = jnp.pad(x, ((0, mp - M), (0, kp - K)))

    grid = (mp // tm, ng, kp // tk)

    in_bytes = wt_pad.dtype.itemsize
    out_bytes = jnp.dtype(out_dtype).itemsize
    has_bias = bias_pad is not None
    working_set = (
        2 * (tm * tk + tk * tn) * in_bytes   # double-buffered MXU operands
        + 2 * tm * tn * out_bytes            # double-buffered output tile
        + tm * tn * 4                        # f32 accumulator
        + (2 * tn * 4 if has_bias else 0)    # bias tile
    )
    vmem_limit = int(min(max(working_set * 5 // 4, 8 * 1024 * 1024),
                         vmem_budget))

    x_spec = pl.BlockSpec((tm, tk), lambda i, j, k: (i, k))
    w_spec = pl.BlockSpec((tk, tn), lambda i, j, k: (k, j))
    o_spec = pl.BlockSpec((tm, tn), lambda i, j, k: (i, j))
    scratch = [pltpu.VMEM((tm, tn), jnp.float32)]
    cparams = pltpu.CompilerParams(
        dimension_semantics=("parallel", "parallel", "arbitrary"),
        vmem_limit_bytes=vmem_limit,
    )
    out_shape = jax.ShapeDtypeStruct((mp, np_out), out_dtype)

    if has_bias:
        b_spec = pl.BlockSpec((1, tn), lambda i, j, k: (0, j))
        y = pl.pallas_call(
            _matmul_bias_kernel,
            out_shape=out_shape,
            grid_spec=pltpu.PrefetchScalarGridSpec(
                num_scalar_prefetch=0,
                grid=grid,
                in_specs=[x_spec, w_spec, b_spec],
                out_specs=o_spec,
                scratch_shapes=scratch,
            ),
            compiler_params=cparams,
        )(x, wt_pad, bias_pad)
    else:
        y = pl.pallas_call(
            _matmul_kernel,
            out_shape=out_shape,
            grid_spec=pltpu.PrefetchScalarGridSpec(
                num_scalar_prefetch=0,
                grid=grid,
                in_specs=[x_spec, w_spec],
                out_specs=o_spec,
                scratch_shapes=scratch,
            ),
            compiler_params=cparams,
        )(x, wt_pad)

    if (mp, np_out) != (M, n_used):
        y = y[:M, :n_used]
    return y


# --------------------------------------------------------------------------
# Module
# --------------------------------------------------------------------------
class CustomLinear:
    """JAX/Pallas port of CustomLinear (nn.Linear with optional row slicing).

    Note: MXU inputs are cast to `compute_dtype` (bf16 by default) with f32
    accumulation -- a deliberate inference-numerics choice vs. the f32
    PyTorch module. Pass compute_dtype=jnp.float32 for bit-closer results.
    """

    def __init__(self, in_features, out_features, bias=False, *, key=None,
                 compute_dtype=jnp.bfloat16):
        self.in_features = in_features
        self.out_features = out_features
        self.compute_dtype = jnp.dtype(compute_dtype)

        if key is None:
            key = jax.random.PRNGKey(0)
        wkey, bkey = jax.random.split(key)
        bound = 1.0 / (in_features ** 0.5)
        # PyTorch-convention weight (out_features, in_features), f32 master.
        self.weight = jax.random.uniform(
            wkey, (out_features, in_features), jnp.float32, -bound, bound
        )
        self.bias = (
            jax.random.uniform(bkey, (out_features,), jnp.float32, -bound, bound)
            if bias else None
        )

        # --- per-generation tiling, fixed once per layer ------------------
        self._vmem_budget, dual_core = _tpu_config()

        n_min = _round_up(out_features, 128)
        cap_n = 1024
        if dual_core and n_min > 128:
            # guarantee >= 2 N blocks so both TensorCores get work.
            cap_n = min(cap_n, max(128, ((n_min // 2) // 128) * 128))
        self._tn = _pick_dim_tile(out_features, cap_n)
        self._tk = _pick_dim_tile(in_features, 2048)

        kp = _round_up(in_features, self._tk)
        np_ = _round_up(out_features, self._tn)

        # Pre-transposed, compute-dtype, tile-padded weight (K, N) -- built
        # ONCE; every forward (full or sliced) reads it zero-copy.
        wt = jnp.asarray(self.weight.T, dtype=self.compute_dtype)
        self.wt_padded = jnp.pad(
            wt, ((0, kp - in_features), (0, np_ - out_features))
        )
        if bias:
            self.bias_padded = (
                jnp.pad(self.bias, (0, np_ - out_features))
                .astype(jnp.float32)
                .reshape(1, np_)
            )
        else:
            self.bias_padded = None

    # ----------------------------------------------------------------------
    def _pick_tm(self, M):
        if M <= 128:
            tm = _round_up(max(M, 1), 16)       # bf16 packs 2 rows / sublane
        else:
            tm = _pick_dim_tile(M, 1024, base=128)
        # VMEM guard: shrink only tm (weight tiles are baked into padding).
        in_bytes = self.compute_dtype.itemsize
        while tm > 16:
            ws = (2 * (tm * self._tk + self._tk * self._tn) * in_bytes
                  + 2 * tm * self._tn * 4 + tm * self._tn * 4)
            if ws <= self._vmem_budget:
                break
            tm = max(16, _round_up(tm // 2, 16))
        return tm

    # ----------------------------------------------------------------------
    def __call__(self, x, use_first_x_columns=None):
        if use_first_x_columns is None:
            n_used = self.out_features
        else:
            n_used = int(use_first_x_columns)
            if not (1 <= n_used <= self.out_features):
                raise ValueError(
                    f"use_first_x_columns={n_used} out of range "
                    f"[1, {self.out_features}]"
                )

        orig_shape = x.shape
        x2d = x.reshape(-1, self.in_features)
        tm = self._pick_tm(x2d.shape[0])

        y2d = _linear_forward(
            x2d, self.wt_padded, self.bias_padded,
            tm=tm, tn=self._tn, tk=self._tk,
            n_used=n_used, vmem_budget=self._vmem_budget,
        )
        return y2d.reshape(*orig_shape[:-1], n_used)


# --------------------------------------------------------------------------
if __name__ == "__main__":
    key = jax.random.PRNGKey(0)
    xkey, mkey, bkey = jax.random.split(key, 3)

    batch, seq, in_features, out_features = 2, 8, 32, 64
    x = jax.random.normal(xkey, (batch, seq, in_features), dtype=jnp.float32)

    # References computed on the same bf16-rounded operands the kernel uses.
    x_ref = x.astype(jnp.bfloat16).astype(jnp.float32)

    # --- no-bias module: full + sliced forward ----------------------------
    mod = CustomLinear(in_features, out_features, bias=False, key=mkey)
    w_ref = mod.weight.astype(jnp.bfloat16).astype(jnp.float32)

    y = mod(x)
    jax.block_until_ready(y)
    y_exp = jnp.einsum("bsk,nk->bsn", x_ref, w_ref,
                       precision=jax.lax.Precision.HIGHEST)
    assert y.shape == (batch, seq, out_features)
    assert jnp.allclose(y, y_exp, atol=2e-4, rtol=2e-4)

    k = 16
    y_slice = mod(x, use_first_x_columns=k)
    jax.block_until_ready(y_slice)
    y_slice_exp = jnp.einsum("bsk,nk->bsn", x_ref, w_ref[:k, :],
                             precision=jax.lax.Precision.HIGHEST)
    assert y_slice.shape == (batch, seq, k)
    assert jnp.allclose(y_slice, y_slice_exp, atol=2e-4, rtol=2e-4)

    # --- bias module: fused-bias epilogue path -----------------------------
    mod_b = CustomLinear(in_features, out_features, bias=True, key=bkey)
    wb_ref = mod_b.weight.astype(jnp.bfloat16).astype(jnp.float32)
    y_b = mod_b(x)
    jax.block_until_ready(y_b)
    y_b_exp = jnp.einsum("bsk,nk->bsn", x_ref, wb_ref,
                         precision=jax.lax.Precision.HIGHEST) + mod_b.bias
    assert y_b.shape == (batch, seq, out_features)
    assert jnp.allclose(y_b, y_b_exp, atol=2e-4, rtol=2e-4)

    # sliced + bias path
    y_bs = mod_b(x, use_first_x_columns=k)
    jax.block_until_ready(y_bs)
    y_bs_exp = jnp.einsum("bsk,nk->bsn", x_ref, wb_ref[:k, :],
                          precision=jax.lax.Precision.HIGHEST) + mod_b.bias[:k]
    assert y_bs.shape == (batch, seq, k)
    assert jnp.allclose(y_bs, y_bs_exp, atol=2e-4, rtol=2e-4)

    print("KERNEL_OK")
</pallas_src>

<mosaic_0001>
module attributes {stable_mosaic.version = 11 : i64} {
  func.func @_matmul_kernel(%arg0: i32, %arg1: i32, %arg2: i32, %arg3: memref<16x128xbf16, #tpu.memory_space<vmem>>, %arg4: memref<128x128xbf16, #tpu.memory_space<vmem>>, %arg5: memref<16x128xf32, #tpu.memory_space<vmem>>, %arg6: memref<16x128xf32, #tpu.memory_space<vmem>>) attributes {dimension_semantics = [#tpu.dimension_semantics<parallel>, #tpu.dimension_semantics<parallel>, #tpu.dimension_semantics<arbitrary>], iteration_bounds = array<i64: 1, 1, 1>, scalar_prefetch = 0 : i64, scratch_operands = 1 : i64, tpu.core_type = #tpu.core_type<tc>, window_params = [{transform_indices = @transform_0, window_bounds = array<i64: 16, 128>}, {transform_indices = @transform_1, window_bounds = array<i64: 128, 128>}, {transform_indices = @transform_2, window_bounds = array<i64: 16, 128>}]} {
    %c0_i32 = arith.constant 0 : i32
    %0 = arith.cmpi eq, %arg2, %c0_i32 : i32
    %1 = arith.extui %0 : i1 to i32
    %c0_i32_0 = arith.constant 0 : i32
    %2 = arith.cmpi ne, %1, %c0_i32_0 : i32
    scf.if %2 {
      %cst_10 = arith.constant 0.000000e+00 : f32
      %12 = vector.broadcast %cst_10 : f32 to vector<16x128xf32>
      %c0_11 = arith.constant 0 : index
      %c0_12 = arith.constant 0 : index
      %13 = vector.load %arg6[%c0_11, %c0_12] : memref<16x128xf32, #tpu.memory_space<vmem>>, vector<16x128xf32>
      tpu.vector_store %arg6[%c0_11, %c0_12], %12 {strides = array<i32>} : memref<16x128xf32, #tpu.memory_space<vmem>>, vector<16x128xf32>,
    } else {
    }
    %c0 = arith.constant 0 : index
    %c0_1 = arith.constant 0 : index
    %3 = vector.load %arg6[%c0, %c0_1] : memref<16x128xf32, #tpu.memory_space<vmem>>, vector<16x128xf32>
    %c0_2 = arith.constant 0 : index
    %c0_3 = arith.constant 0 : index
    %4 = vector.load %arg3[%c0_2, %c0_3] : memref<16x128xbf16, #tpu.memory_space<vmem>>, vector<16x128xbf16>
    %c0_4 = arith.constant 0 : index
    %c0_5 = arith.constant 0 : index
    %5 = vector.load %arg4[%c0_4, %c0_5] : memref<128x128xbf16, #tpu.memory_space<vmem>>, vector<128x128xbf16>
    %cst = arith.constant dense<0.000000e+00> : vector<16x128xf32>
    %6 = tpu.matmul %4, %5, %cst {dimension_numbers = #tpu.dot_dimension_numbers<[1], [0], [0], [1], [0, 0, 1, 1], [], []>} : vector<16x128xbf16>, vector<128x128xbf16>, vector<16x128xf32> -> vector<16x128xf32>
    %7 = arith.addf %3, %6 : vector<16x128xf32>
    %c0_6 = arith.constant 0 : index
    %c0_7 = arith.constant 0 : index
    %8 = vector.load %arg6[%c0_6, %c0_7] : memref<16x128xf32, #tpu.memory_space<vmem>>, vector<16x128xf32>
    tpu.vector_store %arg6[%c0_6, %c0_7], %7 {strides = array<i32>} : memref<16x128xf32, #tpu.memory_space<vmem>>, vector<16x128xf32>,
    %c0_i32_8 = arith.constant 0 : i32
    %9 = arith.cmpi eq, %arg2, %c0_i32_8 : i32
    %10 = arith.extui %9 : i1 to i32
    %c0_i32_9 = arith.constant 0 : i32
    %11 = arith.cmpi ne, %10, %c0_i32_9 : i32
    scf.if %11 {
      %c0_10 = arith.constant 0 : index
      %c0_11 = arith.constant 0 : index
      %12 = vector.load %arg6[%c0_10, %c0_11] : memref<16x128xf32, #tpu.memory_space<vmem>>, vector<16x128xf32>
      %c0_12 = arith.constant 0 : index
      %c0_13 = arith.constant 0 : index
      %13 = vector.load %arg5[%c0_12, %c0_13] : memref<16x128xf32, #tpu.memory_space<vmem>>, vector<16x128xf32>
      tpu.vector_store %arg5[%c0_12, %c0_13], %12 {strides = array<i32>} : memref<16x128xf32, #tpu.memory_space<vmem>>, vector<16x128xf32>,
    } else {
    }
    return
  }
  func.func @transform_0(%arg0: i32, %arg1: i32, %arg2: i32) -> (i32, i32) {
    %c0_i32 = arith.constant 0 : i32
    return %arg0, %arg2 : i32, i32
  }
  func.func @transform_1(%arg0: i32, %arg1: i32, %arg2: i32) -> (i32, i32) {
    %c0_i32 = arith.constant 0 : i32
    return %arg2, %arg1 : i32, i32
  }
  func.func @transform_2(%arg0: i32, %arg1: i32, %arg2: i32) -> (i32, i32) {
    %c0_i32 = arith.constant 0 : i32
    return %arg0, %arg1 : i32, i32
  }
}

</mosaic_0001>

<llo_original>
// kernel: _linear_forward.1
$region0: #{_linear_forward.1}
  #allocation0 [shape = 'u32[]', space=smem, size = 0x4, offset = 0x4, fixed_abs, tag = 'smem constant byte address 0x4 - core index']
  #allocation1 [shape = 'u32[144,128]{1,0:T(1,128)}', space=vmem, size = 0x12000, scoped, tag = 'internal scratch']
  #allocation2 [shape = 'f32[16,128]{1,0:T(8,128)}', space=vmem, size = 0x2000, scoped, tag = 'scratch operand']
  %s0 = inlined_call_operand.vmem [shape: bf16[16,128], index: 0, kind: input, shape index: {}]
  %s1 = inlined_call_operand.hbm [shape: bf16[128,128], index: 1, kind: input, shape index: {}]
  %s2 = inlined_call_operand.hbm [shape: f32[16,128], index: 2, kind: output, shape index: {}]
  %s3 = sld [smem:[#allocation0]]
  $region30: #{_linear_forward.1} parent=0
    _
  %s5 = ssub.s32 1, %s3
  %s6 = scalar_select 0, %s5, %s3
  $region1: #{_linear_forward.1} parent=0
    #allocation3 [shape = 'u8[32768]{0}', space=vmem, size = 0x8000, scoped, tag = 'input window, operand 1, single buffered']
    #allocation4 [shape = 's32[1]{0}', space=sflag, size = 0x4, scoped, tag = 'scoped memory for _linear_forward.1']
    #allocation5 [shape = 's32[1]{0}', space=sflag, size = 0x4, scoped, tag = 'scoped memory for _linear_forward.1']
    #allocation6 [shape = 'u8[8192]{0}', space=vmem, size = 0x2000, scoped, tag = 'output window, operand 0, single buffered']
    %7 = vsyncpa [#allocation4], 0
    %8 = vsyncpa [#allocation5], 0
    // Predicated region
    $region2: #{_linear_forward.1} parent=1 // pred_check
      _
    $region3: #{_linear_forward.1} parent=1 // pred_check_branch
      %10 = sbr.rel (0) target = $region5
    $region4: #{_linear_forward.1} parent=1 // pred_region
      _
    $region5: #{_linear_forward.1} parent=1 // pred_fallthru
      _
    // Predicated region
    $region6: #{_linear_forward.1} parent=1 // pred_check
      _
    $region7: #{_linear_forward.1} parent=1 // pred_check_branch
      %12 = sbr.rel (0) target = $region9
    $region8: #{_linear_forward.1} parent=1 // pred_region
      %s14 = ssub.s32 1024, 1024
      %15 = vsyncadd [#allocation4], %s14
      %s16 = sshll.u32 [#allocation3], 4
      %s17 = int_to_ptr.vmem [resolvable:$true] %s16
      %22 = dma.hbm_to_vmem [thread:$0]  %s1, 1024, %s17, [#allocation4], 64, 64, 4
    $region9: #{_linear_forward.1} parent=1 // pred_fallthru
      _
    // Predicated region
    $region10: #{_linear_forward.1} parent=1 // pred_check
      _
    $region11: #{_linear_forward.1} parent=1 // pred_check_branch
      %24 = sbr.rel (0) target = $region13
    $region12: #{_linear_forward.1} parent=1 // pred_region
      %25 = dma.done [#allocation4], 1024
    $region13: #{_linear_forward.1} parent=1 // pred_fallthru
      _
    %p27 = scmp.eq.s32.totalorder 0, 0
    // Predicated region
    $region14: #{_linear_forward.1} parent=1 // pred_check
      %p28 = pneg %p27
    $region15: #{_linear_forward.1} parent=1 // pred_check_branch
      %30 = sbr.rel (%p28) target = $region17
    $region16: #{_linear_forward.1} parent=1 // pred_region
      %31 = vst [vmem:[#allocation2] sm:$0xff] 0.0
      %32 = vst [vmem:[#allocation2 + $0x8] sm:$0xff] 0.0
    $region17: #{_linear_forward.1} parent=1 // pred_fallthru
      _
    %v33 = vld [vmem:[#allocation2] sm:$0xff]
    %v34 = vld [vmem:[#allocation2 + $0x8] sm:$0xff]
    %v35 = vld [vmem:[%s0] sm:$0xf]
    %v36 = vld [vmem:[%s0 + $0x4] sm:$0xf]
    %v37 = vld [vmem:[#allocation3] sm:$0xf]
    %v38 = vld [vmem:[#allocation3 + $0x4] sm:$0xf]
    %v39 = vld [vmem:[#allocation3 + $0x8] sm:$0xf]
    %v40 = vld [vmem:[#allocation3 + $0xc] sm:$0xf]
    %v41 = vld [vmem:[#allocation3 + $0x10] sm:$0xf]
    %v42 = vld [vmem:[#allocation3 + $0x14] sm:$0xf]
    %v43 = vld [vmem:[#allocation3 + $0x18] sm:$0xf]
    %v44 = vld [vmem:[#allocation3 + $0x1c] sm:$0xf]
    %v45 = vld [vmem:[#allocation3 + $0x20] sm:$0xf]
    %v46 = vld [vmem:[#allocation3 + $0x24] sm:$0xf]
    %v47 = vld [vmem:[#allocation3 + $0x28] sm:$0xf]
    %v48 = vld [vmem:[#allocation3 + $0x2c] sm:$0xf]
    %v49 = vld [vmem:[#allocation3 + $0x30] sm:$0xf]
    %v50 = vld [vmem:[#allocation3 + $0x34] sm:$0xf]
    %v51 = vld [vmem:[#allocation3 + $0x38] sm:$0xf]
    %v52 = vld [vmem:[#allocation3 + $0x3c] sm:$0xf]
    %v55 = vunpack.c.l.b16 %v35
    %v56 = vunpack.c.l.b16 %v36
    %v57 = vpack.c.b16 %v56, %v55
    %v75 = vunpack.c.l.b16 %v37
    %v76 = vunpack.c.l.b16 %v38
    %v77 = vunpack.c.l.b16 %v39
    %v78 = vunpack.c.l.b16 %v40
    %v79 = vunpack.c.l.b16 %v41
    %v80 = vunpack.c.l.b16 %v42
    %v81 = vunpack.c.l.b16 %v43
    %v82 = vunpack.c.l.b16 %v44
    %v83 = vunpack.c.l.b16 %v45
    %v84 = vunpack.c.l.b16 %v46
    %v85 = vunpack.c.l.b16 %v47
    %v86 = vunpack.c.l.b16 %v48
    %v87 = vunpack.c.l.b16 %v49
    %v88 = vunpack.c.l.b16 %v50
    %v89 = vunpack.c.l.b16 %v51
    %v90 = vunpack.c.l.b16 %v52
    %v91 = vpack.c.b16 %v76, %v75
    %v92 = vpack.c.b16 %v78, %v77
    %v93 = vpack.c.b16 %v80, %v79
    %v94 = vpack.c.b16 %v82, %v81
    %v95 = vpack.c.b16 %v84, %v83
    %v96 = vpack.c.b16 %v86, %v85
    %v97 = vpack.c.b16 %v88, %v87
    %v98 = vpack.c.b16 %v90, %v89
    %107 = vmatprep.subr.bf16.mxu0 0
    %108 = vmatpush1.bf16.msra.mxu0 %v98
    %109 = vmatprep.subr.bf16.mxu0 0
    %110 = vmatpush1.bf16.msra.mxu0 %v97
    %111 = vmatprep.subr.bf16.mxu0 0
    %112 = vmatpush1.bf16.msra.mxu0 %v96
    %113 = vmatprep.subr.bf16.mxu0 0
    %114 = vmatpush1.bf16.msra.mxu0 %v95
    %115 = vmatprep.subr.bf16.mxu0 0
    %116 = vmatpush1.bf16.msra.mxu0 %v94
    %117 = vmatprep.subr.bf16.mxu0 0
    %118 = vmatpush1.bf16.msra.mxu0 %v93
    %119 = vmatprep.subr.bf16.mxu0 0
    %120 = vmatpush1.bf16.msra.mxu0 %v92
    %121 = vmatprep.subr.bf16.mxu0 0
    %122 = vmatpush1.bf16.msra.mxu0 %v91
    %123 = vmatprep.subr.bf16.mxu0 0
    %124 = vmatpush2.bf16.msra.mxu0 0
    %125 = vmatprep.subr.bf16.mxu0 0
    %126 = vmatpush2.bf16.msra.mxu0 0
    %127 = vmatprep.subr.bf16.mxu0 0
    %128 = vmatpush2.bf16.msra.mxu0 0
    %129 = vmatprep.subr.bf16.mxu0 0
    %130 = vmatpush2.bf16.msra.mxu0 0
    %131 = vmatprep.subr.bf16.mxu0 0
    %132 = vmatpush2.bf16.msra.mxu0 0
    %133 = vmatprep.subr.bf16.mxu0 0
    %134 = vmatpush2.bf16.msra.mxu0 0
    %135 = vmatprep.subr.bf16.mxu0 0
    %136 = vmatpush2.bf16.msra.mxu0 0
    %137 = vmatprep.subr.bf16.mxu0 0
    %138 = vmatpush2.bf16.msra.mxu0 0
    %139 = vmatprep.mubr.bf16.mxu0 0
    %140 = vmatmul.mubr.bf16.gmra.mxu0 %v57
    %v141 = vpop.f32.mrf.mxu0
    %v142 = vadd.f32 0.0, %v141
    %v143 = vpop.f32.mrf.mxu0
    %v144 = vpop.f32.mrf.mxu0
    %v145 = vadd.f32 0.0, %v144
    %v146 = vpop.f32.mrf.mxu0
    %147 = vdwg.mxu0
    %v148 = vadd.f32 %v33, %v142
    %v149 = vadd.f32 %v34, %v145
    %150 = vst [vmem:[#allocation2] sm:$0xff] %v148
    %151 = vst [vmem:[#allocation2 + $0x8] sm:$0xff] %v149
    // Predicated region
    $region18: #{_linear_forward.1} parent=1 // pred_check
      %p152 = pneg %p27
    $region19: #{_linear_forward.1} parent=1 // pred_check_branch
      %154 = sbr.rel (%p152) target = $region21
    $region20: #{_linear_forward.1} parent=1 // pred_region
      %v155 = vld [vmem:[#allocation2] sm:$0xff]
      %v156 = vld [vmem:[#allocation2 + $0x8] sm:$0xff]
      %157 = vst [vmem:[#allocation6] sm:$0xff] %v155
      %158 = vst [vmem:[#allocation6 + $0x8] sm:$0xff] %v156
    $region21: #{_linear_forward.1} parent=1 // pred_fallthru
      _
    // Predicated region
    $region22: #{_linear_forward.1} parent=1 // pred_check
      _
    $region23: #{_linear_forward.1} parent=1 // pred_check_branch
      %160 = sbr.rel (0) target = $region25
    $region24: #{_linear_forward.1} parent=1 // pred_region
      %s162 = ssub.s32 256, 256
      %163 = vsyncadd [#allocation5], %s162
      %s164 = sshll.u32 [#allocation6], 4
      %s165 = int_to_ptr.vmem [resolvable:$true] %s164
      %170 = dma.vmem_to_hbm [thread:$0]  %s165, 256, %s2, [#allocation5], 128, 128, 8
    $region25: #{_linear_forward.1} parent=1 // pred_fallthru
      _
    // Predicated region
    $region26: #{_linear_forward.1} parent=1 // pred_check
      _
    $region27: #{_linear_forward.1} parent=1 // pred_check_branch
      %172 = sbr.rel (0) target = $region29
    $region28: #{_linear_forward.1} parent=1 // pred_region
      %173 = dma.done [#allocation5], 256
    $region29: #{_linear_forward.1} parent=1 // pred_fallthru
      _
    %174 = vsyncpa [#allocation4], 1
    %175 = vsyncpa [#allocation5], 1

</llo_original>
